<compile_context>
chip_gen: v6e
topology: v6e:2x2x1
jax: 0.10.0
libtpu: 0.0.40
codegen_flags: <defaults>
</compile_context>

<pallas_src>
import jax
import jax.numpy as jnp
from jax.experimental import pallas as pl
from jax.experimental.pallas import tpu as pltpu

IN_FEATURES = 2
HIDDEN = 2
OUT_FEATURES = 1

LANE = 128                    # lane granularity (last-dim tiling unit)
TILE_LANES_MAX = 128 * 1024   # ~1 MiB f32 input block (2 rows x 131072 lanes)


def gauss(x):
    return jnp.exp(-x * x)


def test_actor_kernel(w1_ref, b1_ref, w2_ref, b2_ref, x_ref, o_ref):
    """Fused forward pass on one batch tile, batch on the lane axis.

    w1_ref: (2, 2)  f32 SMEM   fc1 weight, PyTorch (out, in) layout
    b1_ref: (2,)    f32 SMEM   fc1 bias
    w2_ref: (1, 2)  f32 SMEM   fc2 weight, PyTorch (out, in) layout
    b2_ref: (1,)    f32 SMEM   fc2 bias
    x_ref : (2, T)  f32 VMEM   input features (rows = features, lanes = batch)
    o_ref : (1, T)  f32 VMEM   output (lane-dense)
    """
    x0 = x_ref[0:1, :]   # (1, T) feature 0 across the batch tile
    x1 = x_ref[1:2, :]   # (1, T) feature 1 across the batch tile

    # fc1 + Gauss, computed on the VPU with SMEM scalar weights.
    h0 = gauss(x0 * w1_ref[0, 0] + x1 * w1_ref[0, 1] + b1_ref[0])
    h1 = gauss(x0 * w1_ref[1, 0] + x1 * w1_ref[1, 1] + b1_ref[1])

    # fc2
    o_ref[...] = h0 * w2_ref[0, 0] + h1 * w2_ref[0, 1] + b2_ref[0]


@jax.jit
def test_actor_forward(x, w1, b1, w2, b2):
    """x: (B, 2); w1: (2, 2) (out, in); b1: (2,); w2: (1, 2) (out, in); b2: (1,).

    Returns (B, 1), matching TestActor.forward.
    """
    B = x.shape[0]
    # Batch tile on the lane axis: multiple of 128, capped at ~1 MiB input blocks.
    tile = min(TILE_LANES_MAX, -(-B // LANE) * LANE)
    Bp = -(-B // tile) * tile          # pad only the (small) lane tail
    grid = (Bp // tile,)

    # Put batch on lanes, features on sublanes; tail padding is <= one tile of zeros.
    x_t = jnp.pad(x.astype(jnp.float32).T, ((0, 0), (0, Bp - B)))

    smem_spec = pl.BlockSpec(memory_space=pltpu.MemorySpace.SMEM)

    out_p = pl.pallas_call(
        test_actor_kernel,
        out_shape=jax.ShapeDtypeStruct((OUT_FEATURES, Bp), jnp.float32),
        grid=grid,
        in_specs=[
            smem_spec,  # w1
            smem_spec,  # b1
            smem_spec,  # w2
            smem_spec,  # b2
            pl.BlockSpec((IN_FEATURES, tile), lambda i: (0, i)),
        ],
        out_specs=pl.BlockSpec((OUT_FEATURES, tile), lambda i: (0, i)),
        compiler_params=pltpu.CompilerParams(
            dimension_semantics=("parallel",),   # megacore sharding on v7x
        ),
    )(
        w1.astype(jnp.float32),
        b1.astype(jnp.float32),
        w2.astype(jnp.float32),
        b2.astype(jnp.float32),
        x_t,
    )

    # Cheap tail slice (4 B/row output) + reshape to the PyTorch output shape.
    return out_p[0, :B].reshape(B, OUT_FEATURES)


def test_actor_reference(x, w1, b1, w2, b2):
    """Pure-JAX reference of the PyTorch forward() (nn.Linear (out, in) layout)."""
    h = gauss(x @ w1.T + b1)
    return h @ w2.T + b2


if __name__ == "__main__":
    key = jax.random.PRNGKey(0)
    k_x, k_w1, k_b1, k_w2, k_b2 = jax.random.split(key, 5)

    # Small deterministic example consistent with Linear(2,2) -> Linear(2,1).
    B = 8
    x = jax.random.normal(k_x, (B, IN_FEATURES), dtype=jnp.float32)

    # nn.Linear-style uniform(-1/sqrt(fan_in), 1/sqrt(fan_in)) init, stored in the
    # PyTorch (out, in) layout so a real checkpoint could be used unmodified.
    bound1 = 1.0 / (IN_FEATURES ** 0.5)
    w1 = jax.random.uniform(k_w1, (HIDDEN, IN_FEATURES), jnp.float32, -bound1, bound1)
    b1 = jax.random.uniform(k_b1, (HIDDEN,), jnp.float32, -bound1, bound1)
    bound2 = 1.0 / (HIDDEN ** 0.5)
    w2 = jax.random.uniform(k_w2, (OUT_FEATURES, HIDDEN), jnp.float32, -bound2, bound2)
    b2 = jax.random.uniform(k_b2, (OUT_FEATURES,), jnp.float32, -bound2, bound2)

    y = test_actor_forward(x, w1, b1, w2, b2)
    y = jax.block_until_ready(y)

    y_ref = test_actor_reference(x, w1, b1, w2, b2)
    if not bool(jnp.allclose(y, y_ref, atol=1e-5, rtol=1e-5)):
        raise AssertionError("Pallas kernel output mismatch vs reference")

    print("KERNEL_OK")
</pallas_src>

<mosaic_0001>
module attributes {stable_mosaic.version = 11 : i64} {
  func.func @test_actor_kernel(%arg0: i32, %arg1: memref<2x2xf32, #tpu.memory_space<smem>>, %arg2: memref<2xf32, #tpu.memory_space<smem>>, %arg3: memref<1x2xf32, #tpu.memory_space<smem>>, %arg4: memref<1xf32, #tpu.memory_space<smem>>, %arg5: memref<2x128xf32, #tpu.memory_space<vmem>>, %arg6: memref<1x128xf32, #tpu.memory_space<vmem>>) attributes {dimension_semantics = [#tpu.dimension_semantics<parallel>], iteration_bounds = array<i64: 1>, scalar_prefetch = 0 : i64, scratch_operands = 0 : i64, tpu.core_type = #tpu.core_type<tc>, window_params = [{transform_indices = @transform_0, window_bounds = array<i64: 2, 2>}, {transform_indices = @transform_1, window_bounds = array<i64: 2>}, {transform_indices = @transform_2, window_bounds = array<i64: 1, 2>}, {transform_indices = @transform_3, window_bounds = array<i64: 1>}, {transform_indices = @transform_4, window_bounds = array<i64: 2, 128>}, {transform_indices = @transform_5, window_bounds = array<i64: 1, 128>}]} {
    %c0 = arith.constant 0 : index
    %c0_0 = arith.constant 0 : index
    %0 = vector.load %arg5[%c0, %c0_0] : memref<2x128xf32, #tpu.memory_space<vmem>>, vector<1x128xf32>
    %c1 = arith.constant 1 : index
    %c0_1 = arith.constant 0 : index
    %1 = vector.load %arg5[%c1, %c0_1] : memref<2x128xf32, #tpu.memory_space<vmem>>, vector<1x128xf32>
    %c0_2 = arith.constant 0 : index
    %c0_3 = arith.constant 0 : index
    %2 = memref.load %arg1[%c0_2, %c0_3] : memref<2x2xf32, #tpu.memory_space<smem>>
    %3 = vector.broadcast %2 : f32 to vector<1x128xf32>
    %4 = arith.mulf %0, %3 : vector<1x128xf32>
    %c0_4 = arith.constant 0 : index
    %c1_5 = arith.constant 1 : index
    %5 = memref.load %arg1[%c0_4, %c1_5] : memref<2x2xf32, #tpu.memory_space<smem>>
    %6 = vector.broadcast %5 : f32 to vector<1x128xf32>
    %7 = arith.mulf %1, %6 : vector<1x128xf32>
    %8 = arith.addf %4, %7 : vector<1x128xf32>
    %c0_6 = arith.constant 0 : index
    %9 = memref.load %arg2[%c0_6] : memref<2xf32, #tpu.memory_space<smem>>
    %10 = vector.broadcast %9 : f32 to vector<1x128xf32>
    %11 = arith.addf %8, %10 : vector<1x128xf32>
    %cst = arith.constant 0.000000e+00 : f32
    %12 = vector.broadcast %cst : f32 to vector<1x128xf32>
    %13 = arith.subf %12, %11 : vector<1x128xf32>
    %14 = arith.mulf %13, %11 : vector<1x128xf32>
    %15 = math.exp %14 : vector<1x128xf32>
    %c1_7 = arith.constant 1 : index
    %c0_8 = arith.constant 0 : index
    %16 = memref.load %arg1[%c1_7, %c0_8] : memref<2x2xf32, #tpu.memory_space<smem>>
    %17 = vector.broadcast %16 : f32 to vector<1x128xf32>
    %18 = arith.mulf %0, %17 : vector<1x128xf32>
    %c1_9 = arith.constant 1 : index
    %c1_10 = arith.constant 1 : index
    %19 = memref.load %arg1[%c1_9, %c1_10] : memref<2x2xf32, #tpu.memory_space<smem>>
    %20 = vector.broadcast %19 : f32 to vector<1x128xf32>
    %21 = arith.mulf %1, %20 : vector<1x128xf32>
    %22 = arith.addf %18, %21 : vector<1x128xf32>
    %c1_11 = arith.constant 1 : index
    %23 = memref.load %arg2[%c1_11] : memref<2xf32, #tpu.memory_space<smem>>
    %24 = vector.broadcast %23 : f32 to vector<1x128xf32>
    %25 = arith.addf %22, %24 : vector<1x128xf32>
    %cst_12 = arith.constant 0.000000e+00 : f32
    %26 = vector.broadcast %cst_12 : f32 to vector<1x128xf32>
    %27 = arith.subf %26, %25 : vector<1x128xf32>
    %28 = arith.mulf %27, %25 : vector<1x128xf32>
    %29 = math.exp %28 : vector<1x128xf32>
    %c0_13 = arith.constant 0 : index
    %c0_14 = arith.constant 0 : index
    %30 = memref.load %arg3[%c0_13, %c0_14] : memref<1x2xf32, #tpu.memory_space<smem>>
    %31 = vector.broadcast %30 : f32 to vector<1x128xf32>
    %32 = arith.mulf %15, %31 : vector<1x128xf32>
    %c0_15 = arith.constant 0 : index
    %c1_16 = arith.constant 1 : index
    %33 = memref.load %arg3[%c0_15, %c1_16] : memref<1x2xf32, #tpu.memory_space<smem>>
    %34 = vector.broadcast %33 : f32 to vector<1x128xf32>
    %35 = arith.mulf %29, %34 : vector<1x128xf32>
    %36 = arith.addf %32, %35 : vector<1x128xf32>
    %c0_17 = arith.constant 0 : index
    %37 = memref.load %arg4[%c0_17] : memref<1xf32, #tpu.memory_space<smem>>
    %38 = vector.broadcast %37 : f32 to vector<1x128xf32>
    %39 = arith.addf %36, %38 : vector<1x128xf32>
    %c0_18 = arith.constant 0 : index
    %c0_19 = arith.constant 0 : index
    %40 = vector.load %arg6[%c0_18, %c0_19] : memref<1x128xf32, #tpu.memory_space<vmem>>, vector<1x128xf32>
    tpu.vector_store %arg6[%c0_18, %c0_19], %39 {strides = array<i32>} : memref<1x128xf32, #tpu.memory_space<vmem>>, vector<1x128xf32>,
    return
  }
  func.func @transform_0(%arg0: i32) -> (i32, i32) {
    %c0_i32 = arith.constant 0 : i32
    %c0_i32_0 = arith.constant 0 : i32
    %c0_i32_1 = arith.constant 0 : i32
    return %c0_i32, %c0_i32_0 : i32, i32
  }
  func.func @transform_1(%arg0: i32) -> i32 {
    %c0_i32 = arith.constant 0 : i32
    %c0_i32_0 = arith.constant 0 : i32
    return %c0_i32 : i32
  }
  func.func @transform_2(%arg0: i32) -> (i32, i32) {
    %c0_i32 = arith.constant 0 : i32
    %c0_i32_0 = arith.constant 0 : i32
    %c0_i32_1 = arith.constant 0 : i32
    return %c0_i32, %c0_i32_0 : i32, i32
  }
  func.func @transform_3(%arg0: i32) -> i32 {
    %c0_i32 = arith.constant 0 : i32
    %c0_i32_0 = arith.constant 0 : i32
    return %c0_i32 : i32
  }
  func.func @transform_4(%arg0: i32) -> (i32, i32) {
    %c0_i32 = arith.constant 0 : i32
    %c0_i32_0 = arith.constant 0 : i32
    return %c0_i32, %arg0 : i32, i32
  }
  func.func @transform_5(%arg0: i32) -> (i32, i32) {
    %c0_i32 = arith.constant 0 : i32
    %c0_i32_0 = arith.constant 0 : i32
    return %c0_i32, %arg0 : i32, i32
  }
}

</mosaic_0001>

<llo_original>
// kernel: test_actor_forward.1
$region0: #{test_actor_forward.1}
  #allocation0 [shape = 'u32[]', space=smem, size = 0x4, offset = 0x4, fixed_abs, tag = 'smem constant byte address 0x4 - core index']
  #allocation1 [shape = 'u32[144,128]{1,0:T(1,128)}', space=vmem, size = 0x12000, scoped, tag = 'internal scratch']
  #allocation2 [shape = 'f32[1]{0:T(128)S(6)}', space=smem, size = 0x200, scoped, tag = 'scoped memory for test_actor_forward.1']
  %s0 = inlined_call_operand.vmem [shape: f32[2,2], index: 0, kind: input, shape index: {}]
  %s1 = inlined_call_operand.vmem [shape: f32[2], index: 1, kind: input, shape index: {}]
  %s2 = inlined_call_operand.vmem [shape: f32[1,2], index: 2, kind: input, shape index: {}]
  %s3 = inlined_call_operand.<no memory space> [shape: f32[1], index: 3, kind: input, shape index: {}]
  %s4 = inlined_call_operand.vmem [shape: f32[2,128], index: 4, kind: input, shape index: {}]
  %s5 = inlined_call_operand.vmem [shape: f32[1,128], index: 5, kind: output, shape index: {}]
  %s6 = sld [smem:[#allocation0]]
  $region42: #{test_actor_forward.1} parent=0
    _
  %s8 = ssub.s32 1, %s6
  %s9 = scalar_select 0, %s8, %s6
  %10 = sst [smem:[#allocation2]] %s3
  $region1: #{test_actor_forward.1} parent=0
    #allocation3 [shape = 'u8[1024]{0}', space=smem, size = 0x400, scoped, tag = 'input window, operand 0, single buffered']
    #allocation4 [shape = 's32[1]{0}', space=sflag, size = 0x4, scoped, tag = 'scoped memory for test_actor_forward.1']
    #allocation5 [shape = 'u8[512]{0}', space=smem, size = 0x200, scoped, tag = 'input window, operand 1, single buffered']
    #allocation6 [shape = 's32[1]{0}', space=sflag, size = 0x4, scoped, tag = 'scoped memory for test_actor_forward.1']
    #allocation7 [shape = 'u8[512]{0}', space=smem, size = 0x200, scoped, tag = 'input window, operand 2, single buffered']
    %11 = vsyncpa [#allocation4], 0
    %12 = vsyncpa [#allocation6], 0
    // Predicated region
    $region2: #{test_actor_forward.1} parent=1 // pred_check
      _
    $region3: #{test_actor_forward.1} parent=1 // pred_check_branch
      %14 = sbr.rel (0) target = $region5
    $region4: #{test_actor_forward.1} parent=1 // pred_region
      %s16 = ssub.s32 32, 32
      %17 = vsyncadd [#allocation4], %s16
      %s19 = sshll.u32 %s0, 4
      %s20 = int_to_ptr.vmem [resolvable:$true] %s19
      %22 = dma.vmem_to_smem %s20, 32, [#allocation3], [#allocation4]
    $region5: #{test_actor_forward.1} parent=1 // pred_fallthru
      _
    // Predicated region
    $region6: #{test_actor_forward.1} parent=1 // pred_check
      _
    $region7: #{test_actor_forward.1} parent=1 // pred_check_branch
      %24 = sbr.rel (0) target = $region9
    $region8: #{test_actor_forward.1} parent=1 // pred_region
      %s26 = ssub.s32 16, 16
      %27 = vsyncadd [#allocation6], %s26
      %s29 = sshll.u32 %s1, 4
      %s30 = int_to_ptr.vmem [resolvable:$true] %s29
      %32 = dma.vmem_to_smem %s30, 16, [#allocation5], [#allocation6]
    $region9: #{test_actor_forward.1} parent=1 // pred_fallthru
      _
    // Predicated region
    $region10: #{test_actor_forward.1} parent=1 // pred_check
      _
    $region11: #{test_actor_forward.1} parent=1 // pred_check_branch
      %34 = sbr.rel (0) target = $region13
    $region12: #{test_actor_forward.1} parent=1 // pred_region
      %s36 = ssub.s32 16, 16
      %37 = vsyncadd [#allocation6], %s36
      %s39 = sshll.u32 %s2, 4
      %s40 = int_to_ptr.vmem [resolvable:$true] %s39
      %42 = dma.vmem_to_smem %s40, 16, [#allocation7], [#allocation6]
    $region13: #{test_actor_forward.1} parent=1 // pred_fallthru
      _
    // Predicated region
    $region14: #{test_actor_forward.1} parent=1 // pred_check
      _
    $region15: #{test_actor_forward.1} parent=1 // pred_check_branch
      %44 = sbr.rel (0) target = $region17
    $region16: #{test_actor_forward.1} parent=1 // pred_region
      _
    $region17: #{test_actor_forward.1} parent=1 // pred_fallthru
      _
    // Predicated region
    $region18: #{test_actor_forward.1} parent=1 // pred_check
      _
    $region19: #{test_actor_forward.1} parent=1 // pred_check_branch
      %46 = sbr.rel (0) target = $region21
    $region20: #{test_actor_forward.1} parent=1 // pred_region
      _
    $region21: #{test_actor_forward.1} parent=1 // pred_fallthru
      _
    // Predicated region
    $region22: #{test_actor_forward.1} parent=1 // pred_check
      _
    $region23: #{test_actor_forward.1} parent=1 // pred_check_branch
      %48 = sbr.rel (0) target = $region25
    $region24: #{test_actor_forward.1} parent=1 // pred_region
      %49 = dma.done [#allocation4], 32
    $region25: #{test_actor_forward.1} parent=1 // pred_fallthru
      _
    // Predicated region
    $region26: #{test_actor_forward.1} parent=1 // pred_check
      _
    $region27: #{test_actor_forward.1} parent=1 // pred_check_branch
      %51 = sbr.rel (0) target = $region29
    $region28: #{test_actor_forward.1} parent=1 // pred_region
      %52 = dma.done [#allocation6], 16
    $region29: #{test_actor_forward.1} parent=1 // pred_fallthru
      _
    // Predicated region
    $region30: #{test_actor_forward.1} parent=1 // pred_check
      _
    $region31: #{test_actor_forward.1} parent=1 // pred_check_branch
      %54 = sbr.rel (0) target = $region33
    $region32: #{test_actor_forward.1} parent=1 // pred_region
      %55 = dma.done [#allocation6], 16
    $region33: #{test_actor_forward.1} parent=1 // pred_fallthru
      _
    %56 = sfence
    %v57 = vld [vmem:[%s4] sm:$0x1]
    %v58 = vld [vmem:[%s4 + $0x1] sm:$0x1]
    %s59 = sld [smem:[#allocation3]]
    %v60 = vstv %s59
    %v61 = vmul.f32 %v57, %v60
    %s62 = sld [smem:[#allocation3 + $0x1]]
    %v63 = vstv %s62
    %v64 = vmul.f32 %v58, %v63
    %v65 = vadd.f32 %v61, %v64
    %s66 = sld [smem:[#allocation5]]
    %v67 = vstv %s66
    %v68 = vadd.f32 %v65, %v67
    %v69 = vsub.f32 0.0, %v68
    %v70 = vmul.f32 %v69, %v68
    %v71 = vmul.f32 %v70, 1.442695
    %v72 = vpow.pop %v71
    %s73 = sld [smem:[#allocation3 + $0x80]]
    %v74 = vstv %s73
    %v75 = vmul.f32 %v57, %v74
    %s76 = sld [smem:[#allocation3 + $0x81]]
    %v77 = vstv %s76
    %v78 = vmul.f32 %v58, %v77
    %v79 = vadd.f32 %v75, %v78
    %s80 = sld [smem:[#allocation5 + $0x1]]
    %v81 = vstv %s80
    %v82 = vadd.f32 %v79, %v81
    %v83 = vsub.f32 0.0, %v82
    %v84 = vmul.f32 %v83, %v82
    %v85 = vmul.f32 %v84, 1.442695
    %v86 = vpow.pop %v85
    %s87 = sld [smem:[#allocation7]]
    %v88 = vstv %s87
    %v89 = vmul.f32 %v72, %v88
    %s90 = sld [smem:[#allocation7 + $0x1]]
    %v91 = vstv %s90
    %v92 = vmul.f32 %v86, %v91
    %v93 = vadd.f32 %v89, %v92
    %s94 = sld [smem:[#allocation2]]
    %v95 = vstv %s94
    %v96 = vadd.f32 %v93, %v95
    %97 = vst [vmem:[%s5] sm:$0x1] %v96
    // Predicated region
    $region34: #{test_actor_forward.1} parent=1 // pred_check
      _
    $region35: #{test_actor_forward.1} parent=1 // pred_check_branch
      %99 = sbr.rel (0) target = $region37
    $region36: #{test_actor_forward.1} parent=1 // pred_region
      _
    $region37: #{test_actor_forward.1} parent=1 // pred_fallthru
      _
    // Predicated region
    $region38: #{test_actor_forward.1} parent=1 // pred_check
      _
    $region39: #{test_actor_forward.1} parent=1 // pred_check_branch
      %101 = sbr.rel (0) target = $region41
    $region40: #{test_actor_forward.1} parent=1 // pred_region
      _
    $region41: #{test_actor_forward.1} parent=1 // pred_fallthru
      _
    %102 = vsyncpa [#allocation4], 1
    %103 = vsyncpa [#allocation6], 1

</llo_original>
